<compile_context>
chip_gen: v7x
topology: tpu7x:2x2x1
jax: 0.10.0
libtpu: 0.0.40
codegen_flags: <defaults>
</compile_context>

<pallas_src>
import functools
import math

import jax
import jax.numpy as jnp
from jax.experimental import pallas as pl
from jax.experimental.pallas import tpu as pltpu

_NEG_BIG = -1e30  # finite "-inf": keeps the online-max rescale free of 0*inf NaNs


def _hloss_kernel(x_ref, o_ref, m_ref, s_ref, ez_ref, *,
                  softmax, tr, td, d_total, mask_last_d):
    j = pl.program_id(1)
    last_j = pl.num_programs(1) - 1
    x = x_ref[...].astype(jnp.float32)                        # (TR, TD)

    if mask_last_d:
        col = j * td + jax.lax.broadcasted_iota(jnp.int32, (tr, td), 1)
        valid = col < d_total
    else:
        valid = None

    def _rowsum(v):
        return jnp.sum(v, axis=-1, keepdims=True)             # (TR, 1)

    if softmax:
        @pl.when(j == 0)
        def _():
            m_ref[...] = jnp.full_like(m_ref, _NEG_BIG)
            s_ref[...] = jnp.zeros_like(s_ref)
            ez_ref[...] = jnp.zeros_like(ez_ref)

        xm = x if valid is None else jnp.where(valid, x, _NEG_BIG)
        m_old = m_ref[...]
        s_old = s_ref[...]
        ez_old = ez_ref[...]

        m_new = jnp.maximum(m_old, jnp.max(xm, axis=-1, keepdims=True))
        d_m = m_old - m_new                                    # finite, <= 0
        alpha = jnp.exp(d_m)                                   # rescale of old acc
        z = x - m_new
        e = jnp.exp(z)                                         # single exp pass
        ez = e * z
        if valid is not None:
            e = jnp.where(valid, e, 0.0)
            ez = jnp.where(valid, ez, 0.0)

        # online accumulators:  s = sum e^(x-m),  ez = sum e^(x-m) * (x-m)
        s_ref[...] = alpha * s_old + _rowsum(e)
        ez_ref[...] = alpha * (ez_old + d_m * s_old) + _rowsum(ez)
        m_ref[...] = m_new

        @pl.when(j == last_j)
        def _():
            s = s_ref[...]
            ent = jnp.log(s) - ez_ref[...] / s                 # exact division
            o_ref[...] = ent.reshape(1, tr).astype(o_ref.dtype)   # lane-dense store
    else:
        @pl.when(j == 0)
        def _():
            s_ref[...] = jnp.zeros_like(s_ref)

        t = x * jnp.log(x)                                     # NaN at x==0 (torch)
        if valid is not None:
            t = jnp.where(valid, t, 0.0)
        s_ref[...] = s_ref[...] + _rowsum(t)

        @pl.when(j == last_j)
        def _():
            o_ref[...] = (-s_ref[...]).reshape(1, tr).astype(o_ref.dtype)


def _vmem_budget_bytes():
    """3/4 of physical VMEM: ~96 MiB on v5e/v6e, ~48 MiB on v7x."""
    try:
        cap = int(pltpu.get_tpu_info().vmem_capacity_bytes)
    except Exception:
        cap = 64 << 20  # conservative fallback (v7x-sized)
    return (cap * 3) // 4


def _choose_tiles(R, D, d_block=None):
    budget = _vmem_budget_bytes()
    # f32 footprint of one input block; bytes are the only real cap now.
    f32_block_target = min(8 << 20, budget // 7)

    # Split D only when a full-D block would force the row tile below ~256 rows
    # (vocab-sized last dims), otherwise keep a single D block (no masking).
    tr_min = 256
    td_cap = max(128, ((f32_block_target // (4 * tr_min)) // 128) * 128)
    if d_block is not None:
        td = min(D, ((int(d_block) + 127) // 128) * 128)
    elif D <= td_cap:
        td = D
    else:
        td = td_cap

    tr = max(1, f32_block_target // (4 * td))
    tr = min(tr, 32768)            # greatly-raised soft cap; bytes dominate
    if R <= 8:
        tr = max(1, R)             # block equals the full (tiny) row extent
    else:
        tr = min(tr, (R // 8) * 8)
        tr = (tr // 128) * 128 if tr >= 256 else max(8, (tr // 8) * 8)
    return tr, td, budget


def hloss(x, softmax=False, *, d_block=None):
    """Entropy along the last dimension, matching HLoss.forward."""
    orig_shape = x.shape
    D = int(orig_shape[-1])
    lead = orig_shape[:-1]
    R = int(math.prod(lead))

    x2 = x.reshape(R, D)
    tr, td, budget = _choose_tiles(R, D, d_block)
    grid_rows = pl.cdiv(R, tr)
    grid_d = pl.cdiv(D, td)
    mask_last_d = (D % td) != 0

    itemsize = jnp.dtype(x.dtype).itemsize
    in_block_bytes = tr * td * itemsize
    f32_block_bytes = tr * td * 4
    # double-buffered input + a few block-sized f32 temporaries + slack
    need = 2 * in_block_bytes + 6 * f32_block_bytes + (4 << 20)
    vmem_limit = int(max(16 << 20, min(budget, need)))

    r_pad = int(grid_rows) * tr
    d_pad = int(grid_d) * td
    read_bytes = r_pad * d_pad * itemsize
    write_bytes = r_pad * itemsize
    if softmax:
        cost = pl.CostEstimate(flops=7 * r_pad * d_pad,
                               transcendentals=r_pad * d_pad + 4 * r_pad * int(grid_d),
                               bytes_accessed=read_bytes + write_bytes)
    else:
        cost = pl.CostEstimate(flops=2 * r_pad * d_pad,
                               transcendentals=r_pad * d_pad,
                               bytes_accessed=read_bytes + write_bytes)

    kernel = functools.partial(_hloss_kernel, softmax=softmax, tr=tr, td=td,
                               d_total=D, mask_last_d=mask_last_d)

    out = pl.pallas_call(
        kernel,
        out_shape=jax.ShapeDtypeStruct((int(grid_rows), tr), x.dtype),
        grid_spec=pltpu.PrefetchScalarGridSpec(
            num_scalar_prefetch=0,
            grid=(int(grid_rows), int(grid_d)),
            in_specs=[pl.BlockSpec((tr, td), lambda i, j: (i, j))],
            out_specs=pl.BlockSpec((1, tr), lambda i, j: (i, 0)),
            scratch_shapes=[pltpu.VMEM((tr, 1), jnp.float32)] * 3,
        ),
        compiler_params=pltpu.CompilerParams(
            dimension_semantics=("parallel", "arbitrary"),
            vmem_limit_bytes=vmem_limit,
        ),
        cost_estimate=cost,
    )(x2)

    return out.reshape(int(grid_rows) * tr)[:R].reshape(lead)


def _hloss_ref(x, softmax=False):
    x = x.astype(jnp.float32)
    if softmax:
        p = jax.nn.softmax(x, axis=-1)
        logp = jax.nn.log_softmax(x, axis=-1)
        return -jnp.sum(p * logp, axis=-1)
    return -jnp.sum(x * jnp.log(x), axis=-1)


if __name__ == "__main__":
    key = jax.random.PRNGKey(0)
    k1, k2, k3, k4 = jax.random.split(key, 4)

    # softmax=True branch: arbitrary logits, shape (2, 4, 16, 16)
    x_logits = jax.random.normal(k1, (2, 4, 16, 16), dtype=jnp.float32)
    out_sm = jax.block_until_ready(hloss(x_logits, softmax=True))
    ref_sm = _hloss_ref(x_logits, softmax=True)
    assert out_sm.shape == (2, 4, 16)
    assert jnp.allclose(out_sm, ref_sm, atol=1e-4, rtol=1e-4)

    # softmax=False branch: probability-like positive inputs
    x_prob = jax.nn.softmax(
        jax.random.normal(k2, (2, 4, 16, 16), dtype=jnp.float32), axis=-1)
    out_plain = jax.block_until_ready(hloss(x_prob, softmax=False))
    ref_plain = _hloss_ref(x_prob, softmax=False)
    assert out_plain.shape == (2, 4, 16)
    assert jnp.allclose(out_plain, ref_plain, atol=1e-5, rtol=1e-5)

    # ragged row count (R = 35, not a multiple of the row tile)
    x_rag = jax.random.normal(k3, (5, 7, 16), dtype=jnp.float32)
    out_rag = jax.block_until_ready(hloss(x_rag, softmax=True))
    ref_rag = _hloss_ref(x_rag, softmax=True)
    assert out_rag.shape == (5, 7)
    assert jnp.allclose(out_rag, ref_rag, atol=1e-4, rtol=1e-4)

    # forced D split (exercises the online-softmax accumulators + D-edge mask)
    x_big = jax.random.normal(k4, (4, 8, 384), dtype=jnp.float32)
    out_split = jax.block_until_ready(hloss(x_big, softmax=True, d_block=256))
    ref_split = _hloss_ref(x_big, softmax=True)
    assert out_split.shape == (4, 8)
    assert jnp.allclose(out_split, ref_split, atol=1e-4, rtol=1e-4)

    x_big_p = jax.nn.softmax(x_big, axis=-1)
    out_split_p = jax.block_until_ready(hloss(x_big_p, softmax=False, d_block=256))
    ref_split_p = _hloss_ref(x_big_p, softmax=False)
    assert jnp.allclose(out_split_p, ref_split_p, atol=1e-5, rtol=1e-5)

    print("KERNEL_OK")
</pallas_src>

<mosaic_0001>
module attributes {stable_mosaic.version = 11 : i64} {
  func.func @_hloss_kernel(%arg0: i32, %arg1: i32, %arg2: memref<128x16xf32, #tpu.memory_space<vmem>>, %arg3: memref<1x128xf32, #tpu.memory_space<vmem>>, %arg4: memref<128x1xf32, #tpu.memory_space<vmem>>, %arg5: memref<128x1xf32, #tpu.memory_space<vmem>>, %arg6: memref<128x1xf32, #tpu.memory_space<vmem>>) attributes {dimension_semantics = [#tpu.dimension_semantics<parallel>, #tpu.dimension_semantics<arbitrary>], iteration_bounds = array<i64: 1, 1>, scalar_prefetch = 0 : i64, scratch_operands = 3 : i64, tpu.core_type = #tpu.core_type<tc>, window_params = [{transform_indices = @transform_0, window_bounds = array<i64: 128, 16>}, {transform_indices = @transform_1, window_bounds = array<i64: 1, 128>}]} {
    %c0 = arith.constant 0 : index
    %c0_0 = arith.constant 0 : index
    %0 = vector.load %arg2[%c0, %c0_0] : memref<128x16xf32, #tpu.memory_space<vmem>>, vector<128x16xf32>
    %c0_i32 = arith.constant 0 : i32
    %1 = arith.cmpi eq, %arg1, %c0_i32 : i32
    %2 = arith.extui %1 : i1 to i32
    %c0_i32_1 = arith.constant 0 : i32
    %3 = arith.cmpi ne, %2, %c0_i32_1 : i32
    scf.if %3 {
      %cst_18 = arith.constant -1.000000e+30 : f32
      %32 = vector.broadcast %cst_18 : f32 to vector<128x1xf32>
      %c0_19 = arith.constant 0 : index
      %c0_20 = arith.constant 0 : index
      %33 = vector.load %arg4[%c0_19, %c0_20] : memref<128x1xf32, #tpu.memory_space<vmem>>, vector<128x1xf32>
      tpu.vector_store %arg4[%c0_19, %c0_20], %32 {strides = array<i32>} : memref<128x1xf32, #tpu.memory_space<vmem>>, vector<128x1xf32>,
      %cst_21 = arith.constant 0.000000e+00 : f32
      %34 = vector.broadcast %cst_21 : f32 to vector<128x1xf32>
      %c0_22 = arith.constant 0 : index
      %c0_23 = arith.constant 0 : index
      %35 = vector.load %arg5[%c0_22, %c0_23] : memref<128x1xf32, #tpu.memory_space<vmem>>, vector<128x1xf32>
      tpu.vector_store %arg5[%c0_22, %c0_23], %34 {strides = array<i32>} : memref<128x1xf32, #tpu.memory_space<vmem>>, vector<128x1xf32>,
      %cst_24 = arith.constant 0.000000e+00 : f32
      %36 = vector.broadcast %cst_24 : f32 to vector<128x1xf32>
      %c0_25 = arith.constant 0 : index
      %c0_26 = arith.constant 0 : index
      %37 = vector.load %arg6[%c0_25, %c0_26] : memref<128x1xf32, #tpu.memory_space<vmem>>, vector<128x1xf32>
      tpu.vector_store %arg6[%c0_25, %c0_26], %36 {strides = array<i32>} : memref<128x1xf32, #tpu.memory_space<vmem>>, vector<128x1xf32>,
    } else {
    }
    %c0_2 = arith.constant 0 : index
    %c0_3 = arith.constant 0 : index
    %4 = vector.load %arg4[%c0_2, %c0_3] : memref<128x1xf32, #tpu.memory_space<vmem>>, vector<128x1xf32>
    %c0_4 = arith.constant 0 : index
    %c0_5 = arith.constant 0 : index
    %5 = vector.load %arg5[%c0_4, %c0_5] : memref<128x1xf32, #tpu.memory_space<vmem>>, vector<128x1xf32>
    %c0_6 = arith.constant 0 : index
    %c0_7 = arith.constant 0 : index
    %6 = vector.load %arg6[%c0_6, %c0_7] : memref<128x1xf32, #tpu.memory_space<vmem>>, vector<128x1xf32>
    %cst = arith.constant dense<0xFF800000> : vector<128xf32>
    %7 = vector.multi_reduction <maximumf>, %0, %cst [1] : vector<128x16xf32> to vector<128xf32>
    %8 = vector.shape_cast %7 : vector<128xf32> to vector<128x1xf32>
    %9 = arith.maximumf %4, %8 : vector<128x1xf32>
    %10 = arith.subf %4, %9 : vector<128x1xf32>
    %11 = math.exp %10 : vector<128x1xf32>
    %12 = vector.broadcast %9 : vector<128x1xf32> to vector<128x16xf32>
    %13 = arith.subf %0, %12 : vector<128x16xf32>
    %14 = math.exp %13 : vector<128x16xf32>
    %15 = arith.mulf %14, %13 : vector<128x16xf32>
    %16 = arith.mulf %11, %5 : vector<128x1xf32>
    %cst_8 = arith.constant dense<0.000000e+00> : vector<128xf32>
    %17 = vector.multi_reduction <add>, %14, %cst_8 [1] : vector<128x16xf32> to vector<128xf32>
    %18 = vector.shape_cast %17 : vector<128xf32> to vector<128x1xf32>
    %19 = arith.addf %16, %18 : vector<128x1xf32>
    %c0_9 = arith.constant 0 : index
    %c0_10 = arith.constant 0 : index
    %20 = vector.load %arg5[%c0_9, %c0_10] : memref<128x1xf32, #tpu.memory_space<vmem>>, vector<128x1xf32>
    tpu.vector_store %arg5[%c0_9, %c0_10], %19 {strides = array<i32>} : memref<128x1xf32, #tpu.memory_space<vmem>>, vector<128x1xf32>,
    %21 = arith.mulf %10, %5 : vector<128x1xf32>
    %22 = arith.addf %6, %21 : vector<128x1xf32>
    %23 = arith.mulf %11, %22 : vector<128x1xf32>
    %cst_11 = arith.constant dense<0.000000e+00> : vector<128xf32>
    %24 = vector.multi_reduction <add>, %15, %cst_11 [1] : vector<128x16xf32> to vector<128xf32>
    %25 = vector.shape_cast %24 : vector<128xf32> to vector<128x1xf32>
    %26 = arith.addf %23, %25 : vector<128x1xf32>
    %c0_12 = arith.constant 0 : index
    %c0_13 = arith.constant 0 : index
    %27 = vector.load %arg6[%c0_12, %c0_13] : memref<128x1xf32, #tpu.memory_space<vmem>>, vector<128x1xf32>
    tpu.vector_store %arg6[%c0_12, %c0_13], %26 {strides = array<i32>} : memref<128x1xf32, #tpu.memory_space<vmem>>, vector<128x1xf32>,
    %c0_14 = arith.constant 0 : index
    %c0_15 = arith.constant 0 : index
    %28 = vector.load %arg4[%c0_14, %c0_15] : memref<128x1xf32, #tpu.memory_space<vmem>>, vector<128x1xf32>
    tpu.vector_store %arg4[%c0_14, %c0_15], %9 {strides = array<i32>} : memref<128x1xf32, #tpu.memory_space<vmem>>, vector<128x1xf32>,
    %c0_i32_16 = arith.constant 0 : i32
    %29 = arith.cmpi eq, %arg1, %c0_i32_16 : i32
    %30 = arith.extui %29 : i1 to i32
    %c0_i32_17 = arith.constant 0 : i32
    %31 = arith.cmpi ne, %30, %c0_i32_17 : i32
    scf.if %31 {
      %c0_18 = arith.constant 0 : index
      %c0_19 = arith.constant 0 : index
      %32 = vector.load %arg5[%c0_18, %c0_19] : memref<128x1xf32, #tpu.memory_space<vmem>>, vector<128x1xf32>
      %33 = math.log %32 : vector<128x1xf32>
      %c0_20 = arith.constant 0 : index
      %c0_21 = arith.constant 0 : index
      %34 = vector.load %arg6[%c0_20, %c0_21] : memref<128x1xf32, #tpu.memory_space<vmem>>, vector<128x1xf32>
      %35 = arith.divf %34, %32 : vector<128x1xf32>
      %36 = arith.subf %33, %35 : vector<128x1xf32>
      %37 = vector.shape_cast %36 : vector<128x1xf32> to vector<1x128xf32>
      %c0_22 = arith.constant 0 : index
      %c0_23 = arith.constant 0 : index
      %38 = vector.load %arg3[%c0_22, %c0_23] : memref<1x128xf32, #tpu.memory_space<vmem>>, vector<1x128xf32>
      tpu.vector_store %arg3[%c0_22, %c0_23], %37 {strides = array<i32>} : memref<1x128xf32, #tpu.memory_space<vmem>>, vector<1x128xf32>,
    } else {
    }
    return
  }
  func.func @transform_0(%arg0: i32, %arg1: i32) -> (i32, i32) {
    %c0_i32 = arith.constant 0 : i32
    return %arg0, %arg1 : i32, i32
  }
  func.func @transform_1(%arg0: i32, %arg1: i32) -> (i32, i32) {
    %c0_i32 = arith.constant 0 : i32
    %c0_i32_0 = arith.constant 0 : i32
    return %arg0, %c0_i32 : i32, i32
  }
}

</mosaic_0001>

<llo_original>
// kernel: tpu_custom_call.1
$region0: #{tpu_custom_call.1}
  #allocation0 [shape = 'u32[]', space=smem, size = 0x4, offset = 0x4, fixed_abs, tag = 'smem constant byte address 0x4 - core index']
  #allocation1 [shape = 'u32[144,128]{1,0:T(1,128)}', space=vmem, size = 0x12000, scoped, tag = 'internal scratch']
  #allocation2 [shape = 'f32[128,1]{1,0:T(8,128)}', space=vmem, size = 0x10000, scoped, tag = 'scratch operand']
  #allocation3 [shape = 'f32[128,1]{1,0:T(8,128)}', space=vmem, size = 0x10000, scoped, tag = 'scratch operand']
  #allocation4 [shape = 'f32[128,1]{1,0:T(8,128)}', space=vmem, size = 0x10000, scoped, tag = 'scratch operand']
  %s0 = inlined_call_operand.vmem [shape: f32[128,16], index: 0, kind: input, shape index: {}]
  %s1 = inlined_call_operand.hbm [shape: f32[1,128], index: 1, kind: output, shape index: {}]
  %s2 = sld [smem:[#allocation0]]
  $region22: #{tpu_custom_call.1} parent=0
    _
  %s4 = ssub.s32 1, %s2
  %s5 = scalar_select 0, %s4, %s2
  $region1: #{tpu_custom_call.1} parent=0
    #allocation5 [shape = 'u8[512]{0}', space=vmem, size = 0x400, scoped, tag = 'output window, operand 0, single buffered']
    #allocation6 [shape = 's32[1]{0}', space=sflag, size = 0x4, scoped, tag = 'scoped memory for tpu_custom_call.1']
    %6 = vsyncpa [#allocation6], 0
    // Predicated region
    $region2: #{tpu_custom_call.1} parent=1 // pred_check
      _
    $region3: #{tpu_custom_call.1} parent=1 // pred_check_branch
      %8 = sbr.rel (0) target = $region5
    $region4: #{tpu_custom_call.1} parent=1 // pred_region
      _
    $region5: #{tpu_custom_call.1} parent=1 // pred_fallthru
      _
    %v9 = vld [vmem:[%s0] sm:$0xff]
    %v10 = vld [vmem:[%s0 + $0x8] sm:$0xff]
    %v11 = vld [vmem:[%s0 + $0x10] sm:$0xff]
    %v12 = vld [vmem:[%s0 + $0x18] sm:$0xff]
    %v13 = vld [vmem:[%s0 + $0x20] sm:$0xff]
    %v14 = vld [vmem:[%s0 + $0x28] sm:$0xff]
    %v15 = vld [vmem:[%s0 + $0x30] sm:$0xff]
    %v16 = vld [vmem:[%s0 + $0x38] sm:$0xff]
    %v17 = vld [vmem:[%s0 + $0x40] sm:$0xff]
    %v18 = vld [vmem:[%s0 + $0x48] sm:$0xff]
    %v19 = vld [vmem:[%s0 + $0x50] sm:$0xff]
    %v20 = vld [vmem:[%s0 + $0x58] sm:$0xff]
    %v21 = vld [vmem:[%s0 + $0x60] sm:$0xff]
    %v22 = vld [vmem:[%s0 + $0x68] sm:$0xff]
    %v23 = vld [vmem:[%s0 + $0x70] sm:$0xff]
    %v24 = vld [vmem:[%s0 + $0x78] sm:$0xff]
    %p25 = scmp.eq.s32.totalorder 0, 0
    // Predicated region
    $region6: #{tpu_custom_call.1} parent=1 // pred_check
      %p26 = pneg %p25
    $region7: #{tpu_custom_call.1} parent=1 // pred_check_branch
      %28 = sbr.rel (%p26) target = $region9
    $region8: #{tpu_custom_call.1} parent=1 // pred_region
      %vm29 = vcmask 7168
      %30 = vst.msk [vmem:[#allocation2] sm:$0xff] %vm29, -1e+30
      %31 = vst.msk [vmem:[#allocation2 + $0x8] sm:$0xff] %vm29, -1e+30
      %32 = vst.msk [vmem:[#allocation2 + $0x10] sm:$0xff] %vm29, -1e+30
      %33 = vst.msk [vmem:[#allocation2 + $0x18] sm:$0xff] %vm29, -1e+30
      %34 = vst.msk [vmem:[#allocation2 + $0x20] sm:$0xff] %vm29, -1e+30
      %35 = vst.msk [vmem:[#allocation2 + $0x28] sm:$0xff] %vm29, -1e+30
      %36 = vst.msk [vmem:[#allocation2 + $0x30] sm:$0xff] %vm29, -1e+30
      %37 = vst.msk [vmem:[#allocation2 + $0x38] sm:$0xff] %vm29, -1e+30
      %38 = vst.msk [vmem:[#allocation2 + $0x40] sm:$0xff] %vm29, -1e+30
      %39 = vst.msk [vmem:[#allocation2 + $0x48] sm:$0xff] %vm29, -1e+30
      %40 = vst.msk [vmem:[#allocation2 + $0x50] sm:$0xff] %vm29, -1e+30
      %41 = vst.msk [vmem:[#allocation2 + $0x58] sm:$0xff] %vm29, -1e+30
      %42 = vst.msk [vmem:[#allocation2 + $0x60] sm:$0xff] %vm29, -1e+30
      %43 = vst.msk [vmem:[#allocation2 + $0x68] sm:$0xff] %vm29, -1e+30
      %44 = vst.msk [vmem:[#allocation2 + $0x70] sm:$0xff] %vm29, -1e+30
      %45 = vst.msk [vmem:[#allocation2 + $0x78] sm:$0xff] %vm29, -1e+30
      %46 = vst.msk [vmem:[#allocation3] sm:$0xff] %vm29, 0.0
      %47 = vst.msk [vmem:[#allocation3 + $0x8] sm:$0xff] %vm29, 0.0
      %48 = vst.msk [vmem:[#allocation3 + $0x10] sm:$0xff] %vm29, 0.0
      %49 = vst.msk [vmem:[#allocation3 + $0x18] sm:$0xff] %vm29, 0.0
      %50 = vst.msk [vmem:[#allocation3 + $0x20] sm:$0xff] %vm29, 0.0
      %51 = vst.msk [vmem:[#allocation3 + $0x28] sm:$0xff] %vm29, 0.0
      %52 = vst.msk [vmem:[#allocation3 + $0x30] sm:$0xff] %vm29, 0.0
      %53 = vst.msk [vmem:[#allocation3 + $0x38] sm:$0xff] %vm29, 0.0
      %54 = vst.msk [vmem:[#allocation3 + $0x40] sm:$0xff] %vm29, 0.0
      %55 = vst.msk [vmem:[#allocation3 + $0x48] sm:$0xff] %vm29, 0.0
      %56 = vst.msk [vmem:[#allocation3 + $0x50] sm:$0xff] %vm29, 0.0
      %57 = vst.msk [vmem:[#allocation3 + $0x58] sm:$0xff] %vm29, 0.0
      %58 = vst.msk [vmem:[#allocation3 + $0x60] sm:$0xff] %vm29, 0.0
      %59 = vst.msk [vmem:[#allocation3 + $0x68] sm:$0xff] %vm29, 0.0
      %60 = vst.msk [vmem:[#allocation3 + $0x70] sm:$0xff] %vm29, 0.0
      %61 = vst.msk [vmem:[#allocation3 + $0x78] sm:$0xff] %vm29, 0.0
      %62 = vst.msk [vmem:[#allocation4] sm:$0xff] %vm29, 0.0
      %63 = vst.msk [vmem:[#allocation4 + $0x8] sm:$0xff] %vm29, 0.0
      %64 = vst.msk [vmem:[#allocation4 + $0x10] sm:$0xff] %vm29, 0.0
      %65 = vst.msk [vmem:[#allocation4 + $0x18] sm:$0xff] %vm29, 0.0
      %66 = vst.msk [vmem:[#allocation4 + $0x20] sm:$0xff] %vm29, 0.0
      %67 = vst.msk [vmem:[#allocation4 + $0x28] sm:$0xff] %vm29, 0.0
      %68 = vst.msk [vmem:[#allocation4 + $0x30] sm:$0xff] %vm29, 0.0
      %69 = vst.msk [vmem:[#allocation4 + $0x38] sm:$0xff] %vm29, 0.0
      %70 = vst.msk [vmem:[#allocation4 + $0x40] sm:$0xff] %vm29, 0.0
      %71 = vst.msk [vmem:[#allocation4 + $0x48] sm:$0xff] %vm29, 0.0
      %72 = vst.msk [vmem:[#allocation4 + $0x50] sm:$0xff] %vm29, 0.0
      %73 = vst.msk [vmem:[#allocation4 + $0x58] sm:$0xff] %vm29, 0.0
      %74 = vst.msk [vmem:[#allocation4 + $0x60] sm:$0xff] %vm29, 0.0
      %75 = vst.msk [vmem:[#allocation4 + $0x68] sm:$0xff] %vm29, 0.0
      %76 = vst.msk [vmem:[#allocation4 + $0x70] sm:$0xff] %vm29, 0.0
      %77 = vst.msk [vmem:[#allocation4 + $0x78] sm:$0xff] %vm29, 0.0
    $region9: #{tpu_custom_call.1} parent=1 // pred_fallthru
      _
    %v78 = vld [vmem:[#allocation2] sm:$0xff]
    %v79 = vld [vmem:[#allocation2 + $0x8] sm:$0xff]
    %v80 = vld [vmem:[#allocation2 + $0x10] sm:$0xff]
    %v81 = vld [vmem:[#allocation2 + $0x18] sm:$0xff]
    %v82 = vld [vmem:[#allocation2 + $0x20] sm:$0xff]
    %v83 = vld [vmem:[#allocation2 + $0x28] sm:$0xff]
    %v84 = vld [vmem:[#allocation2 + $0x30] sm:$0xff]
    %v85 = vld [vmem:[#allocation2 + $0x38] sm:$0xff]
    %v86 = vld [vmem:[#allocation2 + $0x40] sm:$0xff]
    %v87 = vld [vmem:[#allocation2 + $0x48] sm:$0xff]
    %v88 = vld [vmem:[#allocation2 + $0x50] sm:$0xff]
    %v89 = vld [vmem:[#allocation2 + $0x58] sm:$0xff]
    %v90 = vld [vmem:[#allocation2 + $0x60] sm:$0xff]
    %v91 = vld [vmem:[#allocation2 + $0x68] sm:$0xff]
    %v92 = vld [vmem:[#allocation2 + $0x70] sm:$0xff]
    %v93 = vld [vmem:[#allocation2 + $0x78] sm:$0xff]
    %v94 = vld [vmem:[#allocation3] sm:$0xff]
    %v95 = vld [vmem:[#allocation3 + $0x8] sm:$0xff]
    %v96 = vld [vmem:[#allocation3 + $0x10] sm:$0xff]
    %v97 = vld [vmem:[#allocation3 + $0x18] sm:$0xff]
    %v98 = vld [vmem:[#allocation3 + $0x20] sm:$0xff]
    %v99 = vld [vmem:[#allocation3 + $0x28] sm:$0xff]
    %v100 = vld [vmem:[#allocation3 + $0x30] sm:$0xff]
    %v101 = vld [vmem:[#allocation3 + $0x38] sm:$0xff]
    %v102 = vld [vmem:[#allocation3 + $0x40] sm:$0xff]
    %v103 = vld [vmem:[#allocation3 + $0x48] sm:$0xff]
    %v104 = vld [vmem:[#allocation3 + $0x50] sm:$0xff]
    %v105 = vld [vmem:[#allocation3 + $0x58] sm:$0xff]
    %v106 = vld [vmem:[#allocation3 + $0x60] sm:$0xff]
    %v107 = vld [vmem:[#allocation3 + $0x68] sm:$0xff]
    %v108 = vld [vmem:[#allocation3 + $0x70] sm:$0xff]
    %v109 = vld [vmem:[#allocation3 + $0x78] sm:$0xff]
    %v110 = vld [vmem:[#allocation4] sm:$0xff]
    %v111 = vld [vmem:[#allocation4 + $0x8] sm:$0xff]
    %v112 = vld [vmem:[#allocation4 + $0x10] sm:$0xff]
    %v113 = vld [vmem:[#allocation4 + $0x18] sm:$0xff]
    %v114 = vld [vmem:[#allocation4 + $0x20] sm:$0xff]
    %v115 = vld [vmem:[#allocation4 + $0x28] sm:$0xff]
    %v116 = vld [vmem:[#allocation4 + $0x30] sm:$0xff]
    %v117 = vld [vmem:[#allocation4 + $0x38] sm:$0xff]
    %v118 = vld [vmem:[#allocation4 + $0x40] sm:$0xff]
    %v119 = vld [vmem:[#allocation4 + $0x48] sm:$0xff]
    %v120 = vld [vmem:[#allocation4 + $0x50] sm:$0xff]
    %v121 = vld [vmem:[#allocation4 + $0x58] sm:$0xff]
    %v122 = vld [vmem:[#allocation4 + $0x60] sm:$0xff]
    %v123 = vld [vmem:[#allocation4 + $0x68] sm:$0xff]
    %v124 = vld [vmem:[#allocation4 + $0x70] sm:$0xff]
    %v125 = vld [vmem:[#allocation4 + $0x78] sm:$0xff]
    %vm126 = vcmask 130048
    %v127 = vsel %vm126, %v9, -inf
    %128 = vmax.xlane.f32.xlu0 %v127
    %v129 = vpop.xlane.xlu0 %128
    %v130 = vsel %vm126, %v10, -inf
    %131 = vmax.xlane.f32.xlu0 %v130
    %v132 = vpop.xlane.xlu0 %131
    %v133 = vsel %vm126, %v11, -inf
    %134 = vmax.xlane.f32.xlu0 %v133
    %v135 = vpop.xlane.xlu0 %134
    %v136 = vsel %vm126, %v12, -inf
    %137 = vmax.xlane.f32.xlu0 %v136
    %v138 = vpop.xlane.xlu0 %137
    %v139 = vsel %vm126, %v13, -inf
    %140 = vmax.xlane.f32.xlu0 %v139
    %v141 = vpop.xlane.xlu0 %140
    %v142 = vsel %vm126, %v14, -inf
    %143 = vmax.xlane.f32.xlu0 %v142
    %v144 = vpop.xlane.xlu0 %143
    %v145 = vsel %vm126, %v15, -inf
    %146 = vmax.xlane.f32.xlu0 %v145
    %v147 = vpop.xlane.xlu0 %146
    %v148 = vsel %vm126, %v16, -inf
    %149 = vmax.xlane.f32.xlu0 %v148
    %v150 = vpop.xlane.xlu0 %149
    %v151 = vsel %vm126, %v17, -inf
    %152 = vmax.xlane.f32.xlu0 %v151
    %v153 = vpop.xlane.xlu0 %152
    %v154 = vsel %vm126, %v18, -inf
    %155 = vmax.xlane.f32.xlu0 %v154
    %v156 = vpop.xlane.xlu0 %155
    %v157 = vsel %vm126, %v19, -inf
    %158 = vmax.xlane.f32.xlu0 %v157
    %v159 = vpop.xlane.xlu0 %158
    %v160 = vsel %vm126, %v20, -inf
    %161 = vmax.xlane.f32.xlu0 %v160
    %v162 = vpop.xlane.xlu0 %161
    %v163 = vsel %vm126, %v21, -inf
    %164 = vmax.xlane.f32.xlu0 %v163
    %v165 = vpop.xlane.xlu0 %164
    %v166 = vsel %vm126, %v22, -inf
    %167 = vmax.xlane.f32.xlu0 %v166
    %v168 = vpop.xlane.xlu0 %167
    %v169 = vsel %vm126, %v23, -inf
    %170 = vmax.xlane.f32.xlu0 %v169
    %v171 = vpop.xlane.xlu0 %170
    %v172 = vsel %vm126, %v24, -inf
    %173 = vmax.xlane.f32.xlu0 %v172
    %v174 = vpop.xlane.xlu0 %173
    %v175 = vmax.f32 %v78, %v129
    %v176 = vmax.f32 %v79, %v132
    %v177 = vmax.f32 %v80, %v135
    %v178 = vmax.f32 %v81, %v138
    %v179 = vmax.f32 %v82, %v141
    %v180 = vmax.f32 %v83, %v144
    %v181 = vmax.f32 %v84, %v147
    %v182 = vmax.f32 %v85, %v150
    %v183 = vmax.f32 %v86, %v153
    %v184 = vmax.f32 %v87, %v156
    %v185 = vmax.f32 %v88, %v159
    %v186 = vmax.f32 %v89, %v162
    %v187 = vmax.f32 %v90, %v165
    %v188 = vmax.f32 %v91, %v168
    %v189 = vmax.f32 %v92, %v171
    %v190 = vmax.f32 %v93, %v174
    %v191 = vsub.f32 %v78, %v175
    %v192 = vsub.f32 %v79, %v176
    %v193 = vsub.f32 %v80, %v177
    %v194 = vsub.f32 %v81, %v178
    %v195 = vsub.f32 %v82, %v179
    %v196 = vsub.f32 %v83, %v180
    %v197 = vsub.f32 %v84, %v181
    %v198 = vsub.f32 %v85, %v182
    %v199 = vsub.f32 %v86, %v183
    %v200 = vsub.f32 %v87, %v184
    %v201 = vsub.f32 %v88, %v185
    %v202 = vsub.f32 %v89, %v186
    %v203 = vsub.f32 %v90, %v187
    %v204 = vsub.f32 %v91, %v188
    %v205 = vsub.f32 %v92, %v189
    %v206 = vsub.f32 %v93, %v190
    %v207 = vmul.f32 %v191, 1.442695
    %v208 = vpow.pop %v207
    %v209 = vmul.f32 %v192, 1.442695
    %v210 = vpow.pop %v209
    %v211 = vmul.f32 %v193, 1.442695
    %v212 = vpow.pop %v211
    %v213 = vmul.f32 %v194, 1.442695
    %v214 = vpow.pop %v213
    %v215 = vmul.f32 %v195, 1.442695
    %v216 = vpow.pop %v215
    %v217 = vmul.f32 %v196, 1.442695
    %v218 = vpow.pop %v217
    %v219 = vmul.f32 %v197, 1.442695
    %v220 = vpow.pop %v219
    %v221 = vmul.f32 %v198, 1.442695
    %v222 = vpow.pop %v221
    %v223 = vmul.f32 %v199, 1.442695
    %v224 = vpow.pop %v223
    %v225 = vmul.f32 %v200, 1.442695
    %v226 = vpow.pop %v225
    %v227 = vmul.f32 %v201, 1.442695
    %v228 = vpow.pop %v227
    %v229 = vmul.f32 %v202, 1.442695
    %v230 = vpow.pop %v229
    %v231 = vmul.f32 %v203, 1.442695
    %v232 = vpow.pop %v231
    %v233 = vmul.f32 %v204, 1.442695
    %v234 = vpow.pop %v233
    %v235 = vmul.f32 %v205, 1.442695
    %v236 = vpow.pop %v235
    %v237 = vmul.f32 %v206, 1.442695
    %v238 = vpow.pop %v237
    %240 = vset.pattern.permute.xlu0 0
    %241 = vperm.xlu0 %240, %v175
    %v242 = vpop.permute.xlu0 %241
    %245 = vset.pattern.permute.xlu0 0
    %246 = vperm.xlu0 %245, %v176
    %v247 = vpop.permute.xlu0 %246
    %250 = vset.pattern.permute.xlu0 0
    %251 = vperm.xlu0 %250, %v177
    %v252 = vpop.permute.xlu0 %251
    %255 = vset.pattern.permute.xlu0 0
    %256 = vperm.xlu0 %255, %v178
    %v257 = vpop.permute.xlu0 %256
    %260 = vset.pattern.permute.xlu0 0
    %261 = vperm.xlu0 %260, %v179
    %v262 = vpop.permute.xlu0 %261
    %265 = vset.pattern.permute.xlu0 0
    %266 = vperm.xlu0 %265, %v180
    %v267 = vpop.permute.xlu0 %266
    %270 = vset.pattern.permute.xlu0 0
    %271 = vperm.xlu0 %270, %v181
    %v272 = vpop.permute.xlu0 %271
    %275 = vset.pattern.permute.xlu0 0
    %276 = vperm.xlu0 %275, %v182
    %v277 = vpop.permute.xlu0 %276
    %280 = vset.pattern.permute.xlu0 0
    %281 = vperm.xlu0 %280, %v183
    %v282 = vpop.permute.xlu0 %281
    %285 = vset.pattern.permute.xlu0 0
    %286 = vperm.xlu0 %285, %v184
    %v287 = vpop.permute.xlu0 %286
    %290 = vset.pattern.permute.xlu0 0
    %291 = vperm.xlu0 %290, %v185
    %v292 = vpop.permute.xlu0 %291
    %295 = vset.pattern.permute.xlu0 0
    %296 = vperm.xlu0 %295, %v186
    %v297 = vpop.permute.xlu0 %296
    %300 = vset.pattern.permute.xlu0 0
    %301 = vperm.xlu0 %300, %v187
    %v302 = vpop.permute.xlu0 %301
    %305 = vset.pattern.permute.xlu0 0
    %306 = vperm.xlu0 %305, %v188
    %v307 = vpop.permute.xlu0 %306
    %310 = vset.pattern.permute.xlu0 0
    %311 = vperm.xlu0 %310, %v189
    %v312 = vpop.permute.xlu0 %311
    %315 = vset.pattern.permute.xlu0 0
    %316 = vperm.xlu0 %315, %v190
    %v317 = vpop.permute.xlu0 %316
    %v319 = vsub.f32 %v9, %v242
    %v320 = vsub.f32 %v10, %v247
    %v321 = vsub.f32 %v11, %v252
    %v322 = vsub.f32 %v12, %v257
    %v323 = vsub.f32 %v13, %v262
    %v324 = vsub.f32 %v14, %v267
    %v325 = vsub.f32 %v15, %v272
    %v326 = vsub.f32 %v16, %v277
    %v327 = vsub.f32 %v17, %v282
    %v328 = vsub.f32 %v18, %v287
    %v329 = vsub.f32 %v19, %v292
    %v330 = vsub.f32 %v20, %v297
    %v331 = vsub.f32 %v21, %v302
    %v332 = vsub.f32 %v22, %v307
    %v333 = vsub.f32 %v23, %v312
    %v334 = vsub.f32 %v24, %v317
    %v335 = vmul.f32 %v319, 1.442695
    %v336 = vpow.pop %v335
    %v337 = vmul.f32 %v320, 1.442695
    %v338 = vpow.pop %v337
    %v339 = vmul.f32 %v321, 1.442695
    %v340 = vpow.pop %v339
    %v341 = vmul.f32 %v322, 1.442695
    %v342 = vpow.pop %v341
    %v343 = vmul.f32 %v323, 1.442695
    %v344 = vpow.pop %v343
    %v345 = vmul.f32 %v324, 1.442695
    %v346 = vpow.pop %v345
    %v347 = vmul.f32 %v325, 1.442695
    %v348 = vpow.pop %v347
    %v349 = vmul.f32 %v326, 1.442695
    %v350 = vpow.pop %v349
    %v351 = vmul.f32 %v327, 1.442695
    %v352 = vpow.pop %v351
    %v353 = vmul.f32 %v328, 1.442695
    %v354 = vpow.pop %v353
    %v355 = vmul.f32 %v329, 1.442695
    %v356 = vpow.pop %v355
    %v357 = vmul.f32 %v330, 1.442695
    %v358 = vpow.pop %v357
    %v359 = vmul.f32 %v331, 1.442695
    %v360 = vpow.pop %v359
    %v361 = vmul.f32 %v332, 1.442695
    %v362 = vpow.pop %v361
    %v363 = vmul.f32 %v333, 1.442695
    %v364 = vpow.pop %v363
    %v365 = vmul.f32 %v334, 1.442695
    %v366 = vpow.pop %v365
    %v367 = vmul.f32 %v336, %v319
    %v368 = vmul.f32 %v338, %v320
    %v369 = vmul.f32 %v340, %v321
    %v370 = vmul.f32 %v342, %v322
    %v371 = vmul.f32 %v344, %v323
    %v372 = vmul.f32 %v346, %v324
    %v373 = vmul.f32 %v348, %v325
    %v374 = vmul.f32 %v350, %v326
    %v375 = vmul.f32 %v352, %v327
    %v376 = vmul.f32 %v354, %v328
    %v377 = vmul.f32 %v356, %v329
    %v378 = vmul.f32 %v358, %v330
    %v379 = vmul.f32 %v360, %v331
    %v380 = vmul.f32 %v362, %v332
    %v381 = vmul.f32 %v364, %v333
    %v382 = vmul.f32 %v366, %v334
    %v383 = vmul.f32 %v208, %v94
    %v384 = vmul.f32 %v210, %v95
    %v385 = vmul.f32 %v212, %v96
    %v386 = vmul.f32 %v214, %v97
    %v387 = vmul.f32 %v216, %v98
    %v388 = vmul.f32 %v218, %v99
    %v389 = vmul.f32 %v220, %v100
    %v390 = vmul.f32 %v222, %v101
    %v391 = vmul.f32 %v224, %v102
    %v392 = vmul.f32 %v226, %v103
    %v393 = vmul.f32 %v228, %v104
    %v394 = vmul.f32 %v230, %v105
    %v395 = vmul.f32 %v232, %v106
    %v396 = vmul.f32 %v234, %v107
    %v397 = vmul.f32 %v236, %v108
    %v398 = vmul.f32 %v238, %v109
    %v399 = vsel %vm126, %v336, 0.0
    %400 = vadd.xlane.f32.xlu0 %v399
    %v401 = vpop.xlane.xlu0 %400
    %v402 = vsel %vm126, %v338, 0.0
    %403 = vadd.xlane.f32.xlu0 %v402
    %v404 = vpop.xlane.xlu0 %403
    %v405 = vsel %vm126, %v340, 0.0
    %406 = vadd.xlane.f32.xlu0 %v405
    %v407 = vpop.xlane.xlu0 %406
    %v408 = vsel %vm126, %v342, 0.0
    %409 = vadd.xlane.f32.xlu0 %v408
    %v410 = vpop.xlane.xlu0 %409
    %v411 = vsel %vm126, %v344, 0.0
    %412 = vadd.xlane.f32.xlu0 %v411
    %v413 = vpop.xlane.xlu0 %412
    %v414 = vsel %vm126, %v346, 0.0
    %415 = vadd.xlane.f32.xlu0 %v414
    %v416 = vpop.xlane.xlu0 %415
    %v417 = vsel %vm126, %v348, 0.0
    %418 = vadd.xlane.f32.xlu0 %v417
    %v419 = vpop.xlane.xlu0 %418
    %v420 = vsel %vm126, %v350, 0.0
    %421 = vadd.xlane.f32.xlu0 %v420
    %v422 = vpop.xlane.xlu0 %421
    %v423 = vsel %vm126, %v352, 0.0
    %424 = vadd.xlane.f32.xlu0 %v423
    %v425 = vpop.xlane.xlu0 %424
    %v426 = vsel %vm126, %v354, 0.0
    %427 = vadd.xlane.f32.xlu0 %v426
    %v428 = vpop.xlane.xlu0 %427
    %v429 = vsel %vm126, %v356, 0.0
    %430 = vadd.xlane.f32.xlu0 %v429
    %v431 = vpop.xlane.xlu0 %430
    %v432 = vsel %vm126, %v358, 0.0
    %433 = vadd.xlane.f32.xlu0 %v432
    %v434 = vpop.xlane.xlu0 %433
    %v435 = vsel %vm126, %v360, 0.0
    %436 = vadd.xlane.f32.xlu0 %v435
    %v437 = vpop.xlane.xlu0 %436
    %v438 = vsel %vm126, %v362, 0.0
    %439 = vadd.xlane.f32.xlu0 %v438
    %v440 = vpop.xlane.xlu0 %439
    %v441 = vsel %vm126, %v364, 0.0
    %442 = vadd.xlane.f32.xlu0 %v441
    %v443 = vpop.xlane.xlu0 %442
    %v444 = vsel %vm126, %v366, 0.0
    %445 = vadd.xlane.f32.xlu0 %v444
    %v446 = vpop.xlane.xlu0 %445
    %v447 = vadd.f32 %v383, %v401
    %v448 = vadd.f32 %v384, %v404
    %v449 = vadd.f32 %v385, %v407
    %v450 = vadd.f32 %v386, %v410
    %v451 = vadd.f32 %v387, %v413
    %v452 = vadd.f32 %v388, %v416
    %v453 = vadd.f32 %v389, %v419
    %v454 = vadd.f32 %v390, %v422
    %v455 = vadd.f32 %v391, %v425
    %v456 = vadd.f32 %v392, %v428
    %v457 = vadd.f32 %v393, %v431
    %v458 = vadd.f32 %v394, %v434
    %v459 = vadd.f32 %v395, %v437
    %v460 = vadd.f32 %v396, %v440
    %v461 = vadd.f32 %v397, %v443
    %v462 = vadd.f32 %v398, %v446
    %vm463 = vcmask 7168
    %464 = vst.msk [vmem:[#allocation3] sm:$0xff] %vm463, %v447
    %465 = vst.msk [vmem:[#allocation3 + $0x8] sm:$0xff] %vm463, %v448
    %466 = vst.msk [vmem:[#allocation3 + $0x10] sm:$0xff] %vm463, %v449
    %467 = vst.msk [vmem:[#allocation3 + $0x18] sm:$0xff] %vm463, %v450
    %468 = vst.msk [vmem:[#allocation3 + $0x20] sm:$0xff] %vm463, %v451
    %469 = vst.msk [vmem:[#allocation3 + $0x28] sm:$0xff] %vm463, %v452
    %470 = vst.msk [vmem:[#allocation3 + $0x30] sm:$0xff] %vm463, %v453
    %471 = vst.msk [vmem:[#allocation3 + $0x38] sm:$0xff] %vm463, %v454
    %472 = vst.msk [vmem:[#allocation3 + $0x40] sm:$0xff] %vm463, %v455
    %473 = vst.msk [vmem:[#allocation3 + $0x48] sm:$0xff] %vm463, %v456
    %474 = vst.msk [vmem:[#allocation3 + $0x50] sm:$0xff] %vm463, %v457
    %475 = vst.msk [vmem:[#allocation3 + $0x58] sm:$0xff] %vm463, %v458
    %476 = vst.msk [vmem:[#allocation3 + $0x60] sm:$0xff] %vm463, %v459
    %477 = vst.msk [vmem:[#allocation3 + $0x68] sm:$0xff] %vm463, %v460
    %478 = vst.msk [vmem:[#allocation3 + $0x70] sm:$0xff] %vm463, %v461
    %479 = vst.msk [vmem:[#allocation3 + $0x78] sm:$0xff] %vm463, %v462
    %v480 = vmul.f32 %v191, %v94
    %v481 = vmul.f32 %v192, %v95
    %v482 = vmul.f32 %v193, %v96
    %v483 = vmul.f32 %v194, %v97
    %v484 = vmul.f32 %v195, %v98
    %v485 = vmul.f32 %v196, %v99
    %v486 = vmul.f32 %v197, %v100
    %v487 = vmul.f32 %v198, %v101
    %v488 = vmul.f32 %v199, %v102
    %v489 = vmul.f32 %v200, %v103
    %v490 = vmul.f32 %v201, %v104
    %v491 = vmul.f32 %v202, %v105
    %v492 = vmul.f32 %v203, %v106
    %v493 = vmul.f32 %v204, %v107
    %v494 = vmul.f32 %v205, %v108
    %v495 = vmul.f32 %v206, %v109
    %v496 = vadd.f32 %v110, %v480
    %v497 = vadd.f32 %v111, %v481
    %v498 = vadd.f32 %v112, %v482
    %v499 = vadd.f32 %v113, %v483
    %v500 = vadd.f32 %v114, %v484
    %v501 = vadd.f32 %v115, %v485
    %v502 = vadd.f32 %v116, %v486
    %v503 = vadd.f32 %v117, %v487
    %v504 = vadd.f32 %v118, %v488
    %v505 = vadd.f32 %v119, %v489
    %v506 = vadd.f32 %v120, %v490
    %v507 = vadd.f32 %v121, %v491
    %v508 = vadd.f32 %v122, %v492
    %v509 = vadd.f32 %v123, %v493
    %v510 = vadd.f32 %v124, %v494
    %v511 = vadd.f32 %v125, %v495
    %v512 = vmul.f32 %v208, %v496
    %v513 = vmul.f32 %v210, %v497
    %v514 = vmul.f32 %v212, %v498
    %v515 = vmul.f32 %v214, %v499
    %v516 = vmul.f32 %v216, %v500
    %v517 = vmul.f32 %v218, %v501
    %v518 = vmul.f32 %v220, %v502
    %v519 = vmul.f32 %v222, %v503
    %v520 = vmul.f32 %v224, %v504
    %v521 = vmul.f32 %v226, %v505
    %v522 = vmul.f32 %v228, %v506
    %v523 = vmul.f32 %v230, %v507
    %v524 = vmul.f32 %v232, %v508
    %v525 = vmul.f32 %v234, %v509
    %v526 = vmul.f32 %v236, %v510
    %v527 = vmul.f32 %v238, %v511
    %v528 = vsel %vm126, %v367, 0.0
    %529 = vadd.xlane.f32.xlu0 %v528
    %v530 = vpop.xlane.xlu0 %529
    %v531 = vsel %vm126, %v368, 0.0
    %532 = vadd.xlane.f32.xlu0 %v531
    %v533 = vpop.xlane.xlu0 %532
    %v534 = vsel %vm126, %v369, 0.0
    %535 = vadd.xlane.f32.xlu0 %v534
    %v536 = vpop.xlane.xlu0 %535
    %v537 = vsel %vm126, %v370, 0.0
    %538 = vadd.xlane.f32.xlu0 %v537
    %v539 = vpop.xlane.xlu0 %538
    %v540 = vsel %vm126, %v371, 0.0
    %541 = vadd.xlane.f32.xlu0 %v540
    %v542 = vpop.xlane.xlu0 %541
    %v543 = vsel %vm126, %v372, 0.0
    %544 = vadd.xlane.f32.xlu0 %v543
    %v545 = vpop.xlane.xlu0 %544
    %v546 = vsel %vm126, %v373, 0.0
    %547 = vadd.xlane.f32.xlu0 %v546
    %v548 = vpop.xlane.xlu0 %547
    %v549 = vsel %vm126, %v374, 0.0
    %550 = vadd.xlane.f32.xlu0 %v549
    %v551 = vpop.xlane.xlu0 %550
    %v552 = vsel %vm126, %v375, 0.0
    %553 = vadd.xlane.f32.xlu0 %v552
    %v554 = vpop.xlane.xlu0 %553
    %v555 = vsel %vm126, %v376, 0.0
    %556 = vadd.xlane.f32.xlu0 %v555
    %v557 = vpop.xlane.xlu0 %556
    %v558 = vsel %vm126, %v377, 0.0
    %559 = vadd.xlane.f32.xlu0 %v558
    %v560 = vpop.xlane.xlu0 %559
    %v561 = vsel %vm126, %v378, 0.0
    %562 = vadd.xlane.f32.xlu0 %v561
    %v563 = vpop.xlane.xlu0 %562
    %v564 = vsel %vm126, %v379, 0.0
    %565 = vadd.xlane.f32.xlu0 %v564
    %v566 = vpop.xlane.xlu0 %565
    %v567 = vsel %vm126, %v380, 0.0
    %568 = vadd.xlane.f32.xlu0 %v567
    %v569 = vpop.xlane.xlu0 %568
    %v570 = vsel %vm126, %v381, 0.0
    %571 = vadd.xlane.f32.xlu0 %v570
    %v572 = vpop.xlane.xlu0 %571
    %v573 = vsel %vm126, %v382, 0.0
    %574 = vadd.xlane.f32.xlu0 %v573
    %v575 = vpop.xlane.xlu0 %574
    %v576 = vadd.f32 %v512, %v530
    %v577 = vadd.f32 %v513, %v533
    %v578 = vadd.f32 %v514, %v536
    %v579 = vadd.f32 %v515, %v539
    %v580 = vadd.f32 %v516, %v542
    %v581 = vadd.f32 %v517, %v545
    %v582 = vadd.f32 %v518, %v548
    %v583 = vadd.f32 %v519, %v551
    %v584 = vadd.f32 %v520, %v554
    %v585 = vadd.f32 %v521, %v557
    %v586 = vadd.f32 %v522, %v560
    %v587 = vadd.f32 %v523, %v563
    %v588 = vadd.f32 %v524, %v566
    %v589 = vadd.f32 %v525, %v569
    %v590 = vadd.f32 %v526, %v572
    %v591 = vadd.f32 %v527, %v575
    %592 = vst.msk [vmem:[#allocation4] sm:$0xff] %vm463, %v576
    %593 = vst.msk [vmem:[#allocation4 + $0x8] sm:$0xff] %vm463, %v577
    %594 = vst.msk [vmem:[#allocation4 + $0x10] sm:$0xff] %vm463, %v578
    %595 = vst.msk [vmem:[#allocation4 + $0x18] sm:$0xff] %vm463, %v579
    %596 = vst.msk [vmem:[#allocation4 + $0x20] sm:$0xff] %vm463, %v580
    %597 = vst.msk [vmem:[#allocation4 + $0x28] sm:$0xff] %vm463, %v581
    %598 = vst.msk [vmem:[#allocation4 + $0x30] sm:$0xff] %vm463, %v582
    %599 = vst.msk [vmem:[#allocation4 + $0x38] sm:$0xff] %vm463, %v583
    %600 = vst.msk [vmem:[#allocation4 + $0x40] sm:$0xff] %vm463, %v584
    %601 = vst.msk [vmem:[#allocation4 + $0x48] sm:$0xff] %vm463, %v585
    %602 = vst.msk [vmem:[#allocation4 + $0x50] sm:$0xff] %vm463, %v586
    %603 = vst.msk [vmem:[#allocation4 + $0x58] sm:$0xff] %vm463, %v587
    %604 = vst.msk [vmem:[#allocation4 + $0x60] sm:$0xff] %vm463, %v588
    %605 = vst.msk [vmem:[#allocation4 + $0x68] sm:$0xff] %vm463, %v589
    %606 = vst.msk [vmem:[#allocation4 + $0x70] sm:$0xff] %vm463, %v590
    %607 = vst.msk [vmem:[#allocation4 + $0x78] sm:$0xff] %vm463, %v591
    %608 = vst.msk [vmem:[#allocation2] sm:$0xff] %vm463, %v175
    %609 = vst.msk [vmem:[#allocation2 + $0x8] sm:$0xff] %vm463, %v176
    %610 = vst.msk [vmem:[#allocation2 + $0x10] sm:$0xff] %vm463, %v177
    %611 = vst.msk [vmem:[#allocation2 + $0x18] sm:$0xff] %vm463, %v178
    %612 = vst.msk [vmem:[#allocation2 + $0x20] sm:$0xff] %vm463, %v179
    %613 = vst.msk [vmem:[#allocation2 + $0x28] sm:$0xff] %vm463, %v180
    %614 = vst.msk [vmem:[#allocation2 + $0x30] sm:$0xff] %vm463, %v181
    %615 = vst.msk [vmem:[#allocation2 + $0x38] sm:$0xff] %vm463, %v182
    %616 = vst.msk [vmem:[#allocation2 + $0x40] sm:$0xff] %vm463, %v183
    %617 = vst.msk [vmem:[#allocation2 + $0x48] sm:$0xff] %vm463, %v184
    %618 = vst.msk [vmem:[#allocation2 + $0x50] sm:$0xff] %vm463, %v185
    %619 = vst.msk [vmem:[#allocation2 + $0x58] sm:$0xff] %vm463, %v186
    %620 = vst.msk [vmem:[#allocation2 + $0x60] sm:$0xff] %vm463, %v187
    %621 = vst.msk [vmem:[#allocation2 + $0x68] sm:$0xff] %vm463, %v188
    %622 = vst.msk [vmem:[#allocation2 + $0x70] sm:$0xff] %vm463, %v189
    %623 = vst.msk [vmem:[#allocation2 + $0x78] sm:$0xff] %vm463, %v190
    // Predicated region
    $region10: #{tpu_custom_call.1} parent=1 // pred_check
      %p624 = pneg %p25
    $region11: #{tpu_custom_call.1} parent=1 // pred_check_branch
      %626 = sbr.rel (%p624) target = $region13
    $region12: #{tpu_custom_call.1} parent=1 // pred_region
      %v627 = vld [vmem:[#allocation3] sm:$0xff]
      %v628 = vld [vmem:[#allocation3 + $0x8] sm:$0xff]
      %v629 = vld [vmem:[#allocation3 + $0x10] sm:$0xff]
      %v630 = vld [vmem:[#allocation3 + $0x18] sm:$0xff]
      %v631 = vld [vmem:[#allocation3 + $0x20] sm:$0xff]
      %v632 = vld [vmem:[#allocation3 + $0x28] sm:$0xff]
      %v633 = vld [vmem:[#allocation3 + $0x30] sm:$0xff]
      %v634 = vld [vmem:[#allocation3 + $0x38] sm:$0xff]
      %v635 = vld [vmem:[#allocation3 + $0x40] sm:$0xff]
      %v636 = vld [vmem:[#allocation3 + $0x48] sm:$0xff]
      %v637 = vld [vmem:[#allocation3 + $0x50] sm:$0xff]
      %v638 = vld [vmem:[#allocation3 + $0x58] sm:$0xff]
      %v639 = vld [vmem:[#allocation3 + $0x60] sm:$0xff]
      %v640 = vld [vmem:[#allocation3 + $0x68] sm:$0xff]
      %v641 = vld [vmem:[#allocation3 + $0x70] sm:$0xff]
      %v642 = vld [vmem:[#allocation3 + $0x78] sm:$0xff]
      %v643 = vlog2.pop %v627
      %v644 = vmul.f32 %v643, 0.6931472
      %v645 = vlog2.pop %v628
      %v646 = vmul.f32 %v645, 0.6931472
      %v647 = vlog2.pop %v629
      %v648 = vmul.f32 %v647, 0.6931472
      %v649 = vlog2.pop %v630
      %v650 = vmul.f32 %v649, 0.6931472
      %v651 = vlog2.pop %v631
      %v652 = vmul.f32 %v651, 0.6931472
      %v653 = vlog2.pop %v632
      %v654 = vmul.f32 %v653, 0.6931472
      %v655 = vlog2.pop %v633
      %v656 = vmul.f32 %v655, 0.6931472
      %v657 = vlog2.pop %v634
      %v658 = vmul.f32 %v657, 0.6931472
      %v659 = vlog2.pop %v635
      %v660 = vmul.f32 %v659, 0.6931472
      %v661 = vlog2.pop %v636
      %v662 = vmul.f32 %v661, 0.6931472
      %v663 = vlog2.pop %v637
      %v664 = vmul.f32 %v663, 0.6931472
      %v665 = vlog2.pop %v638
      %v666 = vmul.f32 %v665, 0.6931472
      %v667 = vlog2.pop %v639
      %v668 = vmul.f32 %v667, 0.6931472
      %v669 = vlog2.pop %v640
      %v670 = vmul.f32 %v669, 0.6931472
      %v671 = vlog2.pop %v641
      %v672 = vmul.f32 %v671, 0.6931472
      %v673 = vlog2.pop %v642
      %v674 = vmul.f32 %v673, 0.6931472
      %v675 = vld [vmem:[#allocation4] sm:$0xff]
      %v676 = vld [vmem:[#allocation4 + $0x8] sm:$0xff]
      %v677 = vld [vmem:[#allocation4 + $0x10] sm:$0xff]
      %v678 = vld [vmem:[#allocation4 + $0x18] sm:$0xff]
      %v679 = vld [vmem:[#allocation4 + $0x20] sm:$0xff]
      %v680 = vld [vmem:[#allocation4 + $0x28] sm:$0xff]
      %v681 = vld [vmem:[#allocation4 + $0x30] sm:$0xff]
      %v682 = vld [vmem:[#allocation4 + $0x38] sm:$0xff]
      %v683 = vld [vmem:[#allocation4 + $0x40] sm:$0xff]
      %v684 = vld [vmem:[#allocation4 + $0x48] sm:$0xff]
      %v685 = vld [vmem:[#allocation4 + $0x50] sm:$0xff]
      %v686 = vld [vmem:[#allocation4 + $0x58] sm:$0xff]
      %v687 = vld [vmem:[#allocation4 + $0x60] sm:$0xff]
      %v688 = vld [vmem:[#allocation4 + $0x68] sm:$0xff]
      %v689 = vld [vmem:[#allocation4 + $0x70] sm:$0xff]
      %v690 = vld [vmem:[#allocation4 + $0x78] sm:$0xff]
      %v691 = vrcp.pop %v627
      %v692 = vmul.f32 %v675, %v691
      %v693 = vrcp.pop %v628
      %v694 = vmul.f32 %v676, %v693
      %v695 = vrcp.pop %v629
      %v696 = vmul.f32 %v677, %v695
      %v697 = vrcp.pop %v630
      %v698 = vmul.f32 %v678, %v697
      %v699 = vrcp.pop %v631
      %v700 = vmul.f32 %v679, %v699
      %v701 = vrcp.pop %v632
      %v702 = vmul.f32 %v680, %v701
      %v703 = vrcp.pop %v633
      %v704 = vmul.f32 %v681, %v703
      %v705 = vrcp.pop %v634
      %v706 = vmul.f32 %v682, %v705
      %v707 = vrcp.pop %v635
      %v708 = vmul.f32 %v683, %v707
      %v709 = vrcp.pop %v636
      %v710 = vmul.f32 %v684, %v709
      %v711 = vrcp.pop %v637
      %v712 = vmul.f32 %v685, %v711
      %v713 = vrcp.pop %v638
      %v714 = vmul.f32 %v686, %v713
      %v715 = vrcp.pop %v639
      %v716 = vmul.f32 %v687, %v715
      %v717 = vrcp.pop %v640
      %v718 = vmul.f32 %v688, %v717
      %v719 = vrcp.pop %v641
      %v720 = vmul.f32 %v689, %v719
      %v721 = vrcp.pop %v642
      %v722 = vmul.f32 %v690, %v721
      %v723 = vsub.f32 %v644, %v692
      %v724 = vsub.f32 %v646, %v694
      %v725 = vsub.f32 %v648, %v696
      %v726 = vsub.f32 %v650, %v698
      %v727 = vsub.f32 %v652, %v700
      %v728 = vsub.f32 %v654, %v702
      %v729 = vsub.f32 %v656, %v704
      %v730 = vsub.f32 %v658, %v706
      %v731 = vsub.f32 %v660, %v708
      %v732 = vsub.f32 %v662, %v710
      %v733 = vsub.f32 %v664, %v712
      %v734 = vsub.f32 %v666, %v714
      %v735 = vsub.f32 %v668, %v716
      %v736 = vsub.f32 %v670, %v718
      %v737 = vsub.f32 %v672, %v720
      %v738 = vsub.f32 %v674, %v722
      %755 = vset.pattern.permute.xlu0 0
      %756 = vperm.xlu0 %755, %v723
      %v757 = vpop.permute.xlu0 %756
      %758 = vset.pattern.permute.xlu0 0
      %759 = vperm.xlu0 %758, %v724
      %v760 = vpop.permute.xlu0 %759
      %761 = vset.pattern.permute.xlu0 0
      %762 = vperm.xlu0 %761, %v725
      %v763 = vpop.permute.xlu0 %762
      %764 = vset.pattern.permute.xlu0 0
      %765 = vperm.xlu0 %764, %v726
      %v766 = vpop.permute.xlu0 %765
      %767 = vset.pattern.permute.xlu0 0
      %768 = vperm.xlu0 %767, %v727
      %v769 = vpop.permute.xlu0 %768
      %770 = vset.pattern.permute.xlu0 0
      %771 = vperm.xlu0 %770, %v728
      %v772 = vpop.permute.xlu0 %771
      %773 = vset.pattern.permute.xlu0 0
      %774 = vperm.xlu0 %773, %v729
      %v775 = vpop.permute.xlu0 %774
      %776 = vset.pattern.permute.xlu0 0
      %777 = vperm.xlu0 %776, %v730
      %v778 = vpop.permute.xlu0 %777
      %779 = vset.pattern.permute.xlu0 0
      %780 = vperm.xlu0 %779, %v731
      %v781 = vpop.permute.xlu0 %780
      %782 = vset.pattern.permute.xlu0 0
      %783 = vperm.xlu0 %782, %v732
      %v784 = vpop.permute.xlu0 %783
      %785 = vset.pattern.permute.xlu0 0
      %786 = vperm.xlu0 %785, %v733
      %v787 = vpop.permute.xlu0 %786
      %788 = vset.pattern.permute.xlu0 0
      %789 = vperm.xlu0 %788, %v734
      %v790 = vpop.permute.xlu0 %789
      %791 = vset.pattern.permute.xlu0 0
      %792 = vperm.xlu0 %791, %v735
      %v793 = vpop.permute.xlu0 %792
      %794 = vset.pattern.permute.xlu0 0
      %795 = vperm.xlu0 %794, %v736
      %v796 = vpop.permute.xlu0 %795
      %797 = vset.pattern.permute.xlu0 0
      %798 = vperm.xlu0 %797, %v737
      %v799 = vpop.permute.xlu0 %798
      %800 = vset.pattern.permute.xlu0 0
      %801 = vperm.xlu0 %800, %v738
      %v802 = vpop.permute.xlu0 %801
      %v803 = vlaneseq
      %v804 = vand.u32 %v803, 127
      %v805 = vlaneseq
      %v806 = vshrl.u32 %v805, 7
      %v807 = vsub.s32 %v804, %v806
      %v808 = vrot.slane %v757, %v807
      %v809 = vadd.s32 %v804, 4294967288
      %v810 = vlaneseq
      %v811 = vshrl.u32 %v810, 7
      %v812 = vsub.s32 %v809, %v811
      %v813 = vrot.slane %v760, %v812
      %vm814 = vcmask 130112
      %v815 = vsel %vm814, %v813, %v808
      %v816 = vadd.s32 %v804, 4294967280
      %v817 = vlaneseq
      %v818 = vshrl.u32 %v817, 7
      %v819 = vsub.s32 %v816, %v818
      %v820 = vrot.slane %v763, %v819
      %vm821 = vcmask 195712
      %v822 = vsel %vm821, %v820, %v815
      %v823 = vadd.s32 %v804, 4294967272
      %v824 = vlaneseq
      %v825 = vshrl.u32 %v824, 7
      %v826 = vsub.s32 %v823, %v825
      %v827 = vrot.slane %v766, %v826
      %vm828 = vcmask 261312
      %v829 = vsel %vm828, %v827, %v822
      %v830 = vadd.s32 %v804, 4294967264
      %v831 = vlaneseq
      %v832 = vshrl.u32 %v831, 7
      %v833 = vsub.s32 %v830, %v832
      %v834 = vrot.slane %v769, %v833
      %vm835 = vcmask 326912
      %v836 = vsel %vm835, %v834, %v829
      %v837 = vadd.s32 %v804, 4294967256
      %v838 = vlaneseq
      %v839 = vshrl.u32 %v838, 7
      %v840 = vsub.s32 %v837, %v839
      %v841 = vrot.slane %v772, %v840
      %vm842 = vcmask 392512
      %v843 = vsel %vm842, %v841, %v836
      %v844 = vadd.s32 %v804, 4294967248
      %v845 = vlaneseq
      %v846 = vshrl.u32 %v845, 7
      %v847 = vsub.s32 %v844, %v846
      %v848 = vrot.slane %v775, %v847
      %vm849 = vcmask 458112
      %v850 = vsel %vm849, %v848, %v843
      %v851 = vadd.s32 %v804, 4294967240
      %v852 = vlaneseq
      %v853 = vshrl.u32 %v852, 7
      %v854 = vsub.s32 %v851, %v853
      %v855 = vrot.slane %v778, %v854
      %vm856 = vcmask 523712
      %v857 = vsel %vm856, %v855, %v850
      %v858 = vadd.s32 %v804, 4294967232
      %v859 = vlaneseq
      %v860 = vshrl.u32 %v859, 7
      %v861 = vsub.s32 %v858, %v860
      %v862 = vrot.slane %v781, %v861
      %vm863 = vcmask 589312
      %v864 = vsel %vm863, %v862, %v857
      %v865 = vadd.s32 %v804, 4294967224
      %v866 = vlaneseq
      %v867 = vshrl.u32 %v866, 7
      %v868 = vsub.s32 %v865, %v867
      %v869 = vrot.slane %v784, %v868
      %vm870 = vcmask 654912
      %v871 = vsel %vm870, %v869, %v864
      %v872 = vadd.s32 %v804, 4294967216
      %v873 = vlaneseq
      %v874 = vshrl.u32 %v873, 7
      %v875 = vsub.s32 %v872, %v874
      %v876 = vrot.slane %v787, %v875
      %vm877 = vcmask 720512
      %v878 = vsel %vm877, %v876, %v871
      %v879 = vadd.s32 %v804, 4294967208
      %v880 = vlaneseq
      %v881 = vshrl.u32 %v880, 7
      %v882 = vsub.s32 %v879, %v881
      %v883 = vrot.slane %v790, %v882
      %vm884 = vcmask 786112
      %v885 = vsel %vm884, %v883, %v878
      %v886 = vadd.s32 %v804, 4294967200
      %v887 = vlaneseq
      %v888 = vshrl.u32 %v887, 7
      %v889 = vsub.s32 %v886, %v888
      %v890 = vrot.slane %v793, %v889
      %vm891 = vcmask 851712
      %v892 = vsel %vm891, %v890, %v885
      %v893 = vadd.s32 %v804, 4294967192
      %v894 = vlaneseq
      %v895 = vshrl.u32 %v894, 7
      %v896 = vsub.s32 %v893, %v895
      %v897 = vrot.slane %v796, %v896
      %vm898 = vcmask 917312
      %v899 = vsel %vm898, %v897, %v892
      %v900 = vadd.s32 %v804, 4294967184
      %v901 = vlaneseq
      %v902 = vshrl.u32 %v901, 7
      %v903 = vsub.s32 %v900, %v902
      %v904 = vrot.slane %v799, %v903
      %vm905 = vcmask 982912
      %v906 = vsel %vm905, %v904, %v899
      %v907 = vadd.s32 %v804, 4294967176
      %v908 = vlaneseq
      %v909 = vshrl.u32 %v908, 7
      %v910 = vsub.s32 %v907, %v909
      %v911 = vrot.slane %v802, %v910
      %vm912 = vcmask 1048512
      %v913 = vsel %vm912, %v911, %v906
      %915 = vst [vmem:[#allocation5] sm:$0x1] %v913
    $region13: #{tpu_custom_call.1} parent=1 // pred_fallthru
      _
    // Predicated region
    $region14: #{tpu_custom_call.1} parent=1 // pred_check
      _
    $region15: #{tpu_custom_call.1} parent=1 // pred_check_branch
      %917 = sbr.rel (0) target = $region17
    $region16: #{tpu_custom_call.1} parent=1 // pred_region
      %s919 = ssub.s32 16, 16
      %920 = vsyncadd [#allocation6], %s919
      %s922 = sshll.u32 [#allocation5], 4
      %s923 = int_to_ptr.vmem [resolvable:$true] %s922
      %925 = dma.vmem_to_hbm [thread:$0]  %s923, 16, %s1, [#allocation6]
    $region17: #{tpu_custom_call.1} parent=1 // pred_fallthru
      _
    // Predicated region
    $region18: #{tpu_custom_call.1} parent=1 // pred_check
      _
    $region19: #{tpu_custom_call.1} parent=1 // pred_check_branch
      %927 = sbr.rel (0) target = $region21
    $region20: #{tpu_custom_call.1} parent=1 // pred_region
      %928 = dma.done [#allocation6], 16
    $region21: #{tpu_custom_call.1} parent=1 // pred_fallthru
      _
    %929 = vsyncpa [#allocation6], 1

</llo_original>
